<compile_context>
chip_gen: v7x
topology: tpu7x:2x2x1
jax: 0.10.0
libtpu: 0.0.40
codegen_flags: <defaults>
</compile_context>

<pallas_src>
import functools

import jax
import jax.numpy as jnp
from jax import lax
from jax.experimental import pallas as pl
from jax.experimental.pallas import tpu as pltpu

EPS = 1e-5
F32 = jnp.float32
BF16 = jnp.bfloat16


def _round_up(n, m):
    return -(-n // m) * m


def _vmem_capacity_bytes():
    try:
        return int(pltpu.get_tpu_info().vmem_capacity_bytes)
    except Exception:
        return 64 * 1024 * 1024          # v7x-safe fallback


def _bf16_vpu_dtype():
    # v6e / v7x have a bf16 VPU; v5e does not -> keep QE/KE accumulation f32.
    try:
        kind = jax.devices()[0].device_kind.lower()
        if any(t in kind for t in ("v6", "v7", "tpu7", "7x")):
            return BF16
    except Exception:
        pass
    return F32


_VMEM_CAP = _vmem_capacity_bytes()
_VMEM_LIMIT = min(int(_VMEM_CAP * 3 // 4), 100 * 1024 * 1024)
_TILE_BUDGET = _VMEM_CAP // 3
_QE_DTYPE = _bf16_vpu_dtype()


# ----------------------------------------------------------------------------
# Pallas kernel 1: fused (rows, Cin) @ (Cin, Cout) matmul with epilogue
#   y = x @ w                              (MXU, bf16 operands, f32 accumulate)
#   y = y * col_scale + col_shift          (folded eval-mode BatchNorm)
#   y = y * cond_scale[b] + cond_bias[b]   (conditional BN, optional)
#   y = y + res_x @ res_w                  (fused residual 1x1 conv, optional)
#   y = prelu(y)                           (optional; slope from SMEM)
# ----------------------------------------------------------------------------
def _fused_matmul_kernel(*refs, has_cond, has_res, has_prelu):
    x_ref, w_ref, scale_ref, shift_ref = refs[:4]
    idx = 4
    if has_cond:
        cs_ref, cb_ref = refs[idx], refs[idx + 1]
        idx += 2
    if has_res:
        rx_ref, rw_ref = refs[idx], refs[idx + 1]
        idx += 2
    if has_prelu:
        a_ref = refs[idx]
        idx += 1
    o_ref = refs[idx]

    y = jnp.dot(x_ref[0], w_ref[...], preferred_element_type=F32)
    y = y * scale_ref[...] + shift_ref[...]
    if has_cond:
        y = y * cs_ref[0] + cb_ref[0]
    if has_res:
        y = y + jnp.dot(rx_ref[0], rw_ref[...], preferred_element_type=F32)
    if has_prelu:
        a = a_ref[0]
        y = jnp.where(y >= 0, y, a * y)
    o_ref[0] = y.astype(o_ref.dtype)


def _row_tile(R, bytes_per_row, cap=4096):
    """Largest VMEM-budgeted row tile (multiple of 8 dividing R, or full R)."""
    t_max = int(min(cap, max(8, _TILE_BUDGET // max(bytes_per_row, 1))))
    if R <= t_max:
        return R
    t = (t_max // 8) * 8
    while t >= 8:
        if R % t == 0:
            return t
        t -= 8
    # TODO(synk): no multiple-of-8 row divisor fits the VMEM budget; fall back
    # to full rows (may exceed the budget for very large prime-ish R).
    return R


def fused_matmul(x, w, col_scale, col_shift, *, cond_scale=None,
                 cond_bias=None, res_x=None, res_w=None, prelu_a=None,
                 out_dtype=BF16):
    """x: (B, R, Cin) -> (B, R, Cout) with the epilogues fused in-kernel."""
    assert (cond_scale is None) == (cond_bias is None)
    assert (res_x is None) == (res_w is None)
    B, R, Cin = x.shape
    Cout = w.shape[1]

    per_row = (2 * _round_up(Cin, 128) + 3 * _round_up(Cout, 128)) * 4
    if res_x is not None:
        per_row += 2 * _round_up(res_x.shape[2], 128) * 2
    tr = _row_tile(R, per_row)
    grid = (B, R // tr)

    in_specs = [
        pl.BlockSpec((1, tr, Cin), lambda b, t: (b, t, 0)),
        pl.BlockSpec((Cin, Cout), lambda b, t: (0, 0)),
        pl.BlockSpec((1, Cout), lambda b, t: (0, 0)),
        pl.BlockSpec((1, Cout), lambda b, t: (0, 0)),
    ]
    args = [x.astype(BF16), w.astype(BF16),
            col_scale.reshape(1, Cout).astype(F32),
            col_shift.reshape(1, Cout).astype(F32)]
    if cond_scale is not None:
        in_specs += [pl.BlockSpec((1, 1, Cout), lambda b, t: (b, 0, 0)),
                     pl.BlockSpec((1, 1, Cout), lambda b, t: (b, 0, 0))]
        args += [cond_scale.reshape(B, 1, Cout).astype(F32),
                 cond_bias.reshape(B, 1, Cout).astype(F32)]
    if res_x is not None:
        cin_r = res_x.shape[2]
        in_specs += [pl.BlockSpec((1, tr, cin_r), lambda b, t: (b, t, 0)),
                     pl.BlockSpec((cin_r, Cout), lambda b, t: (0, 0))]
        args += [res_x.astype(BF16), res_w.astype(BF16)]
    if prelu_a is not None:
        in_specs.append(pl.BlockSpec(memory_space=pltpu.MemorySpace.SMEM))
        args.append(jnp.asarray(prelu_a, F32).reshape(1))

    kern = functools.partial(_fused_matmul_kernel,
                             has_cond=cond_scale is not None,
                             has_res=res_x is not None,
                             has_prelu=prelu_a is not None)
    return pl.pallas_call(
        kern,
        out_shape=jax.ShapeDtypeStruct((B, R, Cout), out_dtype),
        grid=grid,
        in_specs=in_specs,
        out_specs=pl.BlockSpec((1, tr, Cout), lambda b, t: (b, t, 0)),
        compiler_params=pltpu.CompilerParams(
            dimension_semantics=("parallel", "parallel"),
            vmem_limit_bytes=_VMEM_LIMIT),
    )(*args)


# ----------------------------------------------------------------------------
# Pallas kernel 2: axial-attention core.  Each grid step handles TB
# (batch * orthogonal-dim) slices; q/k arrive pre-oriented as (Z, L, 2*qc),
# v as (Z, gc, L), both lane-dense in their minor axes.
# ----------------------------------------------------------------------------
def _axial_attention_kernel(qk_ref, v_ref, qe_ref, ke_ref, ve_ref, sa_ref,
                            oa_ref, out_ref, *, groups, gc, qc, L, tb,
                            qe_dtype):
    # relative-embedding contractions (VPU): QE[z,i,j] = sum_c q[z,i,c]*qe[c,i,j]
    qk = qk_ref[...].astype(qe_dtype)                          # (Z, L, 2*qc)
    QE = qk[:, :, 0:1] * qe_ref[0].astype(qe_dtype)[None]
    KE = qk[:, :, qc:qc + 1] * ke_ref[0].astype(qe_dtype)[None]
    for c in range(1, qc):
        QE = QE + qk[:, :, c:c + 1] * qe_ref[c].astype(qe_dtype)[None]
        KE = KE + qk[:, :, qc + c:qc + c + 1] * ke_ref[c].astype(qe_dtype)[None]

    # QK[z,i,j] = sum_m QE[z,m,i] * KE[z,m,j]: transposed-LHS batched MXU dot,
    # no explicit (Z, L, L) transpose materialized.
    QK = lax.dot_general(QE.astype(BF16), KE.astype(BF16),
                         dimension_numbers=(((1,), (1,)), ((0,), (0,))),
                         preferred_element_type=F32)           # (Z, L, L)

    # folded eval BatchNorm2d(3*groups) affine + softmax over j (f32 VPU,
    # divide via the EUP approximate reciprocal).
    sim = (QK.reshape(tb, groups, L, L) * sa_ref[0]
           + QE.astype(F32).reshape(tb, groups, L, L) * sa_ref[1]
           + KE.astype(F32).reshape(tb, groups, L, L) * sa_ref[2]
           + sa_ref[3])
    sim = sim - jnp.max(sim, axis=-1, keepdims=True)
    e = jnp.exp(sim)
    probs = e * pl.reciprocal(jnp.sum(e, axis=-1, keepdims=True), approx=True)
    pZ = probs.reshape(tb * groups, L, L)
    pZb = pZ.astype(BF16)

    # attn[z,c,i] = sum_j v[z,c,j] * p[z,i,j]   ("A @ B^T" batched MXU dot)
    attn = lax.dot_general(v_ref[...], pZb,
                           dimension_numbers=(((2,), (2,)), ((0,), (0,))),
                           preferred_element_type=F32)         # (Z, gc, L)

    # attn_emb[z,c,i] = sum_j p[z,i,j] * v_emb[c,i,j]; chunked over the gc
    # channels so the peak live temp is one (Z, L, L) slab, not (Z, gc, L, L).
    cols = []
    for c in range(gc):
        cols.append(jnp.sum(pZ * ve_ref[c].astype(F32)[None], axis=-1))
    attn_emb = jnp.stack(cols, axis=1)                         # (Z, gc, L)

    # folded eval BatchNorm1d(2*out_channels) + sum of the two halves.
    out = (attn.reshape(tb, groups, gc, L) * oa_ref[0]
           + attn_emb.reshape(tb, groups, gc, L) * oa_ref[1]
           + oa_ref[2])
    out_ref[...] = out.astype(out_ref.dtype)


def _attn_batch_tile(BG, groups, gc, qc, L, cap=8):
    lane = _round_up(L, 128)
    sub_l = _round_up(L, 8)
    sub_g = _round_up(gc, 8)
    # grid-invariant blocks (embeddings + affines), double-buffered
    fixed = (2 * (2 * gc) * sub_l * lane * 2
             + (4 * groups + 3 * groups * gc) * lane * 4 * 2)
    # per-(tb, group) slice: live f32 (L, L) temps + double-buffered in/out
    per_z = (5 * sub_l * lane * 4
             + 2 * sub_l * _round_up(2 * qc, 128) * 2          # qk block
             + 2 * sub_g * lane * 2                            # v block
             + 2 * sub_g * lane * 2)                           # out block
    tb_max = (_TILE_BUDGET - fixed) // max(per_z * groups, 1)
    tb = int(max(1, min(cap, BG, tb_max)))
    if BG >= 2:
        tb = min(tb, max(1, BG // 2))     # keep >=2 grid steps for megacore
    while BG % tb:
        tb -= 1
    return tb


def axial_attention_core(qk_i, v, q_emb, k_emb, v_emb, sim_aff, out_aff,
                         groups):
    """qk_i: (BG*G, L, 2*qc) with q in [..., :qc], k in [..., qc:];
       v: (BG*G, gc, L).  Returns (BG, G, gc, L) in bf16."""
    ZG, L, two_qc = qk_i.shape
    qc = two_qc // 2
    gc = v.shape[1]
    BG = ZG // groups
    TB = _attn_batch_tile(BG, groups, gc, qc, L)
    Z = TB * groups

    kern = functools.partial(_axial_attention_kernel, groups=groups, gc=gc,
                             qc=qc, L=L, tb=TB, qe_dtype=_QE_DTYPE)
    return pl.pallas_call(
        kern,
        out_shape=jax.ShapeDtypeStruct((BG, groups, gc, L), BF16),
        grid=(BG // TB,),
        in_specs=[
            pl.BlockSpec((Z, L, two_qc), lambda i: (i, 0, 0)),
            pl.BlockSpec((Z, gc, L), lambda i: (i, 0, 0)),
            pl.BlockSpec((qc, L, L), lambda i: (0, 0, 0)),
            pl.BlockSpec((qc, L, L), lambda i: (0, 0, 0)),
            pl.BlockSpec((gc, L, L), lambda i: (0, 0, 0)),
            pl.BlockSpec((4, groups, 1, L), lambda i: (0, 0, 0, 0)),
            pl.BlockSpec((3, groups, gc, L), lambda i: (0, 0, 0, 0)),
        ],
        out_specs=pl.BlockSpec((TB, groups, gc, L), lambda i: (i, 0, 0, 0)),
        compiler_params=pltpu.CompilerParams(
            dimension_semantics=("parallel",),
            vmem_limit_bytes=_VMEM_LIMIT),
    )(qk_i.astype(BF16), v.astype(BF16), q_emb.astype(BF16),
      k_emb.astype(BF16), v_emb.astype(BF16),
      sim_aff.astype(F32), out_aff.astype(F32))


# ----------------------------------------------------------------------------
# Plain-JAX glue (layout bookkeeping, eval-BN folding, pooling)
# ----------------------------------------------------------------------------
def bn_fold(p):
    scale = p['gamma'] / jnp.sqrt(p['var'] + EPS)
    shift = p['beta'] - p['mean'] * scale
    return scale, shift


def avg_pool2_nhwc(x):
    x = x.astype(F32)
    B, H, W, C = x.shape
    return x.reshape(B, H // 2, 2, W // 2, 2, C).mean(axis=(2, 4))


def axial_attention_layer(x_nhwc, p, dim, groups):
    """One AxialAttentionLayer in eval mode.  x_nhwc: (B, H, W, C) bf16."""
    B, H, W, C = x_nhwc.shape
    gc = C // groups
    qc = gc // 2
    L = H if dim == 0 else W

    # query/key/value mapping: 1x1 Conv1d + folded eval BatchNorm1d epilogue
    qkv_scale, qkv_shift = bn_fold(p['qkv_bn'])
    qkv = fused_matmul(x_nhwc.reshape(B, H * W, C), p['w_qkv'],
                       qkv_scale, qkv_shift, out_dtype=BF16)
    qkv5 = qkv.reshape(B, H, W, groups, 2 * gc)

    # per (batch, orthogonal-dim, group) slices; q/k oriented (L, 2*qc) so the
    # kernel needs no swapaxes, v oriented (gc, L) for the MXU aggregation.
    if dim == 0:
        D1 = W
        qk_i = jnp.transpose(qkv5[..., :gc], (0, 2, 3, 1, 4)
                             ).reshape(B * W * groups, H, gc)
        v = jnp.transpose(qkv5[..., gc:], (0, 2, 3, 4, 1)
                          ).reshape(B * W * groups, gc, H)
    else:
        D1 = H
        qk_i = jnp.transpose(qkv5[..., :gc], (0, 1, 3, 2, 4)
                             ).reshape(B * H * groups, W, gc)
        v = jnp.transpose(qkv5[..., gc:], (0, 1, 3, 4, 2)
                          ).reshape(B * H * groups, gc, W)

    # relative positional embeddings
    idx = (jnp.arange(L)[:, None] - jnp.arange(L)[None, :]) + L - 1
    emb = p['rel_emb'][:, idx]                           # (2*gc, L, L)
    q_emb, k_emb, v_emb = emb[:qc], emb[qc:2 * qc], emb[2 * qc:]

    # similarity BatchNorm2d(3*groups), eval, folded; lane-broadcast over L
    s_scale, s_shift = bn_fold(p['sim_bn'])
    sim_aff = jnp.stack([
        s_scale[:groups], s_scale[groups:2 * groups], s_scale[2 * groups:],
        s_shift[:groups] + s_shift[groups:2 * groups] + s_shift[2 * groups:],
    ])                                                   # (4, G)
    sim_aff = jnp.broadcast_to(sim_aff[:, :, None, None], (4, groups, 1, L))

    # output BatchNorm1d(2*out_channels), eval, folded; channel order is
    # (group, group_channel, {attention_map, attention_map_embedded})
    o_scale, o_shift = bn_fold(p['out_bn'])
    o_scale = o_scale.reshape(groups, gc, 2)
    o_shift = o_shift.reshape(groups, gc, 2)
    out_aff = jnp.stack([o_scale[..., 0], o_scale[..., 1],
                         o_shift[..., 0] + o_shift[..., 1]])  # (3, G, gc)
    out_aff = jnp.broadcast_to(out_aff[..., None], (3, groups, gc, L))

    out = axial_attention_core(qk_i, v, q_emb, k_emb, v_emb, sim_aff, out_aff,
                               groups)                   # (BG, G, gc, L)
    out5 = out.reshape(B, D1, groups, gc, L)
    if dim == 0:
        out_nhwc = jnp.transpose(out5, (0, 4, 1, 2, 3))  # (B, H, W, G, gc)
    else:
        out_nhwc = jnp.transpose(out5, (0, 1, 4, 2, 3))  # (B, H, W, G, gc)
    return out_nhwc.reshape(B, H, W, C)


def axial_attention_block(x, latent, params):
    """Forward pass of AxialAttentionBlock.  x: (B, Cin, H, W) NCHW."""
    groups = params['groups']
    B, Cin, H, W = x.shape
    C = params['in_conv_w'].shape[1]
    x_nhwc = jnp.transpose(x, (0, 2, 3, 1)).astype(BF16)

    # latent-conditioned scale/bias: tiny linears -> plain XLA dots
    in_cond = latent.astype(F32) @ params['in_norm']['lin_w']    # (B, 2C)
    out_cond = latent.astype(F32) @ params['out_norm']['lin_w']

    # input mapping: 1x1 conv + eval BN + conditional scale/bias + PReLU fused
    s_in, t_in = bn_fold(params['in_norm']['bn'])
    y = fused_matmul(x_nhwc.reshape(B, H * W, Cin), params['in_conv_w'],
                     s_in, t_in,
                     cond_scale=in_cond[:, :C], cond_bias=in_cond[:, C:],
                     prelu_a=params['in_act_a'], out_dtype=BF16)
    y = y.reshape(B, H, W, C)

    # axial attention along H then along W (bf16 NHWC activations throughout)
    y = axial_attention_layer(y, params['attn0'], 0, groups)
    y = axial_attention_layer(y, params['attn1'], 1, groups)
    # Dropout2d(p=0.0) -> identity

    # 2x2 average pooling; avgpool and 1x1 conv commute, so the residual
    # branch pools first and its 1x1 conv is fused into the output kernel.
    yp = avg_pool2_nhwc(y)                                # (B, H/2, W/2, C)
    xp = avg_pool2_nhwc(x_nhwc)                           # (B, H/2, W/2, Cin)
    r2 = (H // 2) * (W // 2)

    # output mapping: 1x1 conv + eval BN + conditional scale/bias + fused
    # residual 1x1 conv + final PReLU, all in one kernel.
    s_out, t_out = bn_fold(params['out_norm']['bn'])
    out = fused_matmul(yp.reshape(B, r2, C), params['out_conv_w'],
                       s_out, t_out,
                       cond_scale=out_cond[:, :C], cond_bias=out_cond[:, C:],
                       res_x=xp.reshape(B, r2, Cin),
                       res_w=params['res_conv_w'],
                       prelu_a=params['final_act_a'], out_dtype=F32)
    out = out.reshape(B, H // 2, W // 2, C)
    return jnp.transpose(out, (0, 3, 1, 2))               # back to NCHW


# ----------------------------------------------------------------------------
# Deterministic parameter initialization (shapes follow the PyTorch __init__)
# ----------------------------------------------------------------------------
def init_params(key, in_ch, out_ch, H, W, latent_features, groups):
    gc = out_ch // groups
    keys = jax.random.split(key, 8)

    def nrm(k, shape, s=0.1):
        return s * jax.random.normal(k, shape, dtype=F32)

    def bn(n):
        return dict(gamma=jnp.ones((n,), F32), beta=jnp.zeros((n,), F32),
                    mean=jnp.zeros((n,), F32), var=jnp.ones((n,), F32))

    def attn_params(k, span):
        k1, k2 = jax.random.split(k)
        return dict(
            w_qkv=nrm(k1, (out_ch, 2 * out_ch)),
            qkv_bn=bn(2 * out_ch),
            out_bn=bn(2 * out_ch),
            sim_bn=bn(3 * groups),
            rel_emb=jax.random.normal(k2, (2 * gc, 2 * span - 1), dtype=F32),
        )

    return dict(
        groups=groups,
        in_conv_w=nrm(keys[0], (in_ch, out_ch)),
        in_norm=dict(bn=bn(out_ch),
                     lin_w=nrm(keys[1], (latent_features, 2 * out_ch))),
        in_act_a=jnp.float32(0.25),
        attn0=attn_params(keys[2], H),
        attn1=attn_params(keys[3], W),
        out_conv_w=nrm(keys[4], (out_ch, out_ch)),
        out_norm=dict(bn=bn(out_ch),
                      lin_w=nrm(keys[5], (latent_features, 2 * out_ch))),
        res_conv_w=nrm(keys[6], (in_ch, out_ch)),
        final_act_a=jnp.float32(0.25),
    )


# ----------------------------------------------------------------------------
# Pure-JAX (f32, exact-softmax) reference of the attention core, used as a
# numerical sanity check of the Pallas kernel.
# ----------------------------------------------------------------------------
def _attention_core_reference(q, k, v, q_emb, k_emb, v_emb, sim_aff, out_aff):
    hp = jax.lax.Precision.HIGHEST
    QE = jnp.einsum('bgci,cij->bgij', q, q_emb, precision=hp)
    KE = jnp.einsum('bgci,cij->bgij', k, k_emb, precision=hp)
    QK = jnp.einsum('bgci,bgcj->bgij', QE, KE, precision=hp)
    sim = (QK * sim_aff[0][None] + QE * sim_aff[1][None]
           + KE * sim_aff[2][None] + sim_aff[3][None])
    sim = jax.nn.softmax(sim, axis=-1)
    attn = jnp.einsum('bgij,bgcj->bgci', sim, v, precision=hp)
    attn_e = jnp.einsum('bgij,cij->bgci', sim, v_emb, precision=hp)
    return (attn * out_aff[0][None] + attn_e * out_aff[1][None]
            + out_aff[2][None])


if __name__ == "__main__":
    B, in_ch, out_ch, H, W = 2, 16, 32, 16, 16
    latent_features, groups = 64, 16
    gc = out_ch // groups
    qc = gc // 2

    key = jax.random.PRNGKey(0)
    k_x, k_l, k_p, k_chk = jax.random.split(key, 4)
    x = jax.random.normal(k_x, (B, in_ch, H, W), dtype=F32)
    latent = jax.random.normal(k_l, (B, latent_features), dtype=F32)
    params = init_params(k_p, in_ch, out_ch, H, W, latent_features, groups)

    out = axial_attention_block(x, latent, params)
    out = jax.block_until_ready(out)
    assert out.shape == (B, out_ch, H // 2, W // 2), out.shape
    assert bool(jnp.all(jnp.isfinite(out)))

    # numerical sanity check of the attention-core kernel against a pure-JAX
    # f32 reference evaluated on the same bf16-rounded inputs.
    kq, kk, kv, ke_, ka = jax.random.split(k_chk, 5)
    BGc = 4
    qs = (0.1 * jax.random.normal(kq, (BGc, groups, qc, H), F32)).astype(BF16)
    ks = (0.1 * jax.random.normal(kk, (BGc, groups, qc, H), F32)).astype(BF16)
    vs = (0.1 * jax.random.normal(kv, (BGc, groups, gc, H), F32)).astype(BF16)
    es = jax.random.normal(ke_, (2 * gc, H, H), dtype=F32).astype(BF16)
    aff = 0.1 * jax.random.normal(ka, (7, groups * gc), F32)
    sim4 = (1.0 + aff[:4, :groups]).at[3].add(-1.0)                 # (4, G)
    out3 = (1.0 + aff[4:]).at[2].add(-1.0).reshape(3, groups, gc)   # (3,G,gc)
    sim_aff = jnp.broadcast_to(sim4[:, :, None, None], (4, groups, 1, H))
    out_aff = jnp.broadcast_to(out3[..., None], (3, groups, gc, H))

    qk_i = jnp.transpose(jnp.concatenate([qs, ks], axis=2),
                         (0, 1, 3, 2)).reshape(BGc * groups, H, 2 * qc)
    v_in = vs.reshape(BGc * groups, gc, H)
    got = axial_attention_core(qk_i, v_in, es[:qc], es[qc:2 * qc],
                               es[2 * qc:], sim_aff, out_aff, groups)
    want = _attention_core_reference(
        qs.astype(F32), ks.astype(F32), vs.astype(F32),
        es[:qc].astype(F32), es[qc:2 * qc].astype(F32),
        es[2 * qc:].astype(F32), sim_aff, out_aff)
    got = jax.block_until_ready(got).astype(F32)
    max_err = float(jnp.max(jnp.abs(got - want)))
    assert jnp.allclose(got, want, atol=5e-2, rtol=5e-2), max_err

    print("KERNEL_OK")
</pallas_src>

<mosaic_0001>
module attributes {stable_mosaic.version = 11 : i64} {
  func.func @_fused_matmul_kernel(%arg0: i32, %arg1: i32, %arg2: memref<1x256x16xbf16, #tpu.memory_space<vmem>>, %arg3: memref<16x32xbf16, #tpu.memory_space<vmem>>, %arg4: memref<1x32xf32, #tpu.memory_space<vmem>>, %arg5: memref<1x32xf32, #tpu.memory_space<vmem>>, %arg6: memref<1x1x32xf32, #tpu.memory_space<vmem>>, %arg7: memref<1x1x32xf32, #tpu.memory_space<vmem>>, %arg8: memref<1xf32, #tpu.memory_space<smem>>, %arg9: memref<1x256x32xbf16, #tpu.memory_space<vmem>>) attributes {dimension_semantics = [#tpu.dimension_semantics<parallel>, #tpu.dimension_semantics<parallel>], iteration_bounds = array<i64: 2, 1>, scalar_prefetch = 0 : i64, scratch_operands = 0 : i64, tpu.core_type = #tpu.core_type<tc>, window_params = [{transform_indices = @transform_0, window_bounds = array<i64: 1, 256, 16>}, {pipeline_mode = #tpu.pipeline_mode<synchronous>, transform_indices = @transform_1, window_bounds = array<i64: 16, 32>}, {pipeline_mode = #tpu.pipeline_mode<synchronous>, transform_indices = @transform_2, window_bounds = array<i64: 1, 32>}, {pipeline_mode = #tpu.pipeline_mode<synchronous>, transform_indices = @transform_3, window_bounds = array<i64: 1, 32>}, {transform_indices = @transform_4, window_bounds = array<i64: 1, 1, 32>}, {transform_indices = @transform_5, window_bounds = array<i64: 1, 1, 32>}, {transform_indices = @transform_6, window_bounds = array<i64: 1>}, {transform_indices = @transform_7, window_bounds = array<i64: 1, 256, 32>}]} {
    %c0 = arith.constant 0 : index
    %c0_0 = arith.constant 0 : index
    %c0_1 = arith.constant 0 : index
    %0 = vector.load %arg2[%c0, %c0_0, %c0_1] : memref<1x256x16xbf16, #tpu.memory_space<vmem>>, vector<1x256x16xbf16>
    %1 = vector.shape_cast %0 : vector<1x256x16xbf16> to vector<256x16xbf16>
    %c0_2 = arith.constant 0 : index
    %c0_3 = arith.constant 0 : index
    %2 = vector.load %arg3[%c0_2, %c0_3] : memref<16x32xbf16, #tpu.memory_space<vmem>>, vector<16x32xbf16>
    %cst = arith.constant dense<0.000000e+00> : vector<256x32xf32>
    %3 = tpu.matmul %1, %2, %cst {dimension_numbers = #tpu.dot_dimension_numbers<[1], [0], [0], [1], [0, 0, 1, 1], [], []>} : vector<256x16xbf16>, vector<16x32xbf16>, vector<256x32xf32> -> vector<256x32xf32>
    %c0_4 = arith.constant 0 : index
    %c0_5 = arith.constant 0 : index
    %4 = vector.load %arg4[%c0_4, %c0_5] : memref<1x32xf32, #tpu.memory_space<vmem>>, vector<1x32xf32>
    %5 = vector.broadcast %4 : vector<1x32xf32> to vector<256x32xf32>
    %6 = arith.mulf %3, %5 : vector<256x32xf32>
    %c0_6 = arith.constant 0 : index
    %c0_7 = arith.constant 0 : index
    %7 = vector.load %arg5[%c0_6, %c0_7] : memref<1x32xf32, #tpu.memory_space<vmem>>, vector<1x32xf32>
    %8 = vector.broadcast %7 : vector<1x32xf32> to vector<256x32xf32>
    %9 = arith.addf %6, %8 : vector<256x32xf32>
    %c0_8 = arith.constant 0 : index
    %c0_9 = arith.constant 0 : index
    %c0_10 = arith.constant 0 : index
    %10 = vector.load %arg6[%c0_8, %c0_9, %c0_10] : memref<1x1x32xf32, #tpu.memory_space<vmem>>, vector<1x1x32xf32>
    %11 = vector.shape_cast %10 : vector<1x1x32xf32> to vector<1x32xf32>
    %12 = vector.broadcast %11 : vector<1x32xf32> to vector<256x32xf32>
    %13 = arith.mulf %9, %12 : vector<256x32xf32>
    %c0_11 = arith.constant 0 : index
    %c0_12 = arith.constant 0 : index
    %c0_13 = arith.constant 0 : index
    %14 = vector.load %arg7[%c0_11, %c0_12, %c0_13] : memref<1x1x32xf32, #tpu.memory_space<vmem>>, vector<1x1x32xf32>
    %15 = vector.shape_cast %14 : vector<1x1x32xf32> to vector<1x32xf32>
    %16 = vector.broadcast %15 : vector<1x32xf32> to vector<256x32xf32>
    %17 = arith.addf %13, %16 : vector<256x32xf32>
    %c0_14 = arith.constant 0 : index
    %18 = memref.load %arg8[%c0_14] : memref<1xf32, #tpu.memory_space<smem>>
    %cst_15 = arith.constant 0.000000e+00 : f32
    %19 = vector.broadcast %cst_15 : f32 to vector<256x32xf32>
    %20 = arith.cmpf oge, %17, %19 : vector<256x32xf32>
    %21 = vector.broadcast %18 : f32 to vector<256x32xf32>
    %22 = arith.mulf %21, %17 : vector<256x32xf32>
    %23 = arith.select %20, %17, %22 : vector<256x32xi1>, vector<256x32xf32>
    %24 = arith.truncf %23 : vector<256x32xf32> to vector<256x32xbf16>
    %c0_16 = arith.constant 0 : index
    %c0_17 = arith.constant 0 : index
    %c0_18 = arith.constant 0 : index
    %25 = vector.load %arg9[%c0_16, %c0_17, %c0_18] : memref<1x256x32xbf16, #tpu.memory_space<vmem>>, vector<1x256x32xbf16>
    %26 = vector.shape_cast %25 : vector<1x256x32xbf16> to vector<256x32xbf16>
    %27 = vector.shape_cast %24 : vector<256x32xbf16> to vector<1x256x32xbf16>
    tpu.vector_store %arg9[%c0_16, %c0_17, %c0_18], %27 {strides = array<i32>} : memref<1x256x32xbf16, #tpu.memory_space<vmem>>, vector<1x256x32xbf16>,
    return
  }
  func.func @transform_0(%arg0: i32, %arg1: i32) -> (i32, i32, i32) {
    %c0_i32 = arith.constant 0 : i32
    %c0_i32_0 = arith.constant 0 : i32
    return %arg0, %arg1, %c0_i32 : i32, i32, i32
  }
  func.func @transform_1(%arg0: i32, %arg1: i32) -> (i32, i32) {
    %c0_i32 = arith.constant 0 : i32
    %c0_i32_0 = arith.constant 0 : i32
    %c0_i32_1 = arith.constant 0 : i32
    return %c0_i32, %c0_i32_0 : i32, i32
  }
  func.func @transform_2(%arg0: i32, %arg1: i32) -> (i32, i32) {
    %c0_i32 = arith.constant 0 : i32
    %c0_i32_0 = arith.constant 0 : i32
    %c0_i32_1 = arith.constant 0 : i32
    return %c0_i32, %c0_i32_0 : i32, i32
  }
  func.func @transform_3(%arg0: i32, %arg1: i32) -> (i32, i32) {
    %c0_i32 = arith.constant 0 : i32
    %c0_i32_0 = arith.constant 0 : i32
    %c0_i32_1 = arith.constant 0 : i32
    return %c0_i32, %c0_i32_0 : i32, i32
  }
  func.func @transform_4(%arg0: i32, %arg1: i32) -> (i32, i32, i32) {
    %c0_i32 = arith.constant 0 : i32
    %c0_i32_0 = arith.constant 0 : i32
    %c0_i32_1 = arith.constant 0 : i32
    return %arg0, %c0_i32, %c0_i32_0 : i32, i32, i32
  }
  func.func @transform_5(%arg0: i32, %arg1: i32) -> (i32, i32, i32) {
    %c0_i32 = arith.constant 0 : i32
    %c0_i32_0 = arith.constant 0 : i32
    %c0_i32_1 = arith.constant 0 : i32
    return %arg0, %c0_i32, %c0_i32_0 : i32, i32, i32
  }
  func.func @transform_6(%arg0: i32, %arg1: i32) -> i32 {
    %c0_i32 = arith.constant 0 : i32
    %c0_i32_0 = arith.constant 0 : i32
    return %c0_i32 : i32
  }
  func.func @transform_7(%arg0: i32, %arg1: i32) -> (i32, i32, i32) {
    %c0_i32 = arith.constant 0 : i32
    %c0_i32_0 = arith.constant 0 : i32
    return %arg0, %arg1, %c0_i32 : i32, i32, i32
  }
}

</mosaic_0001>

<llo_original>
// kernel: tpu_custom_call.1
$region0: #{tpu_custom_call.1}
  #allocation0 [shape = 'u32[]', space=smem, size = 0x4, offset = 0x4, fixed_abs, tag = 'smem constant byte address 0x4 - core index']
  #allocation1 [shape = 'u32[144,128]{1,0:T(1,128)}', space=vmem, size = 0x12000, scoped, tag = 'internal scratch']
  #allocation2 [shape = 'f32[1]{0:T(128)S(6)}', space=smem, size = 0x200, scoped, tag = 'scoped memory for tpu_custom_call.1']
  %s0 = inlined_call_operand.vmem [shape: bf16[2,256,16], index: 0, kind: input, shape index: {}]
  %s1 = inlined_call_operand.vmem [shape: bf16[16,32], index: 1, kind: input, shape index: {}]
  %s2 = inlined_call_operand.vmem [shape: f32[1,32], index: 2, kind: input, shape index: {}]
  %s3 = inlined_call_operand.vmem [shape: f32[1,32], index: 3, kind: input, shape index: {}]
  %s4 = inlined_call_operand.vmem [shape: f32[2,1,32], index: 4, kind: input, shape index: {}]
  %s5 = inlined_call_operand.vmem [shape: f32[2,1,32], index: 5, kind: input, shape index: {}]
  %s6 = inlined_call_operand.<no memory space> [shape: f32[1], index: 6, kind: input, shape index: {}]
  %s7 = inlined_call_operand.vmem [shape: bf16[2,256,32], index: 7, kind: output, shape index: {}]
  %s8 = sld [smem:[#allocation0]]
  $region61: #{tpu_custom_call.1} parent=0
    _
  %s10 = ssub.s32 1, %s8
  %s11 = scalar_select 0, %s10, %s8
  %12 = sst [smem:[#allocation2]] %s6
  loop: start=0, step=1, limit=4
  $region2: #{tpu_custom_call.1} parent=0 // loop_pre_header
    _
  $region3: #{tpu_custom_call.1} parent=0 // loop_header
    %s14 = sphi 0, %s18
    %p15 = scmp.ge.s32.totalorder %s14, 4
    %s21 = sphi 0, %s33
    %s22 = sphi 0, %s29
    %s23 = sphi 0, %s21
    %s24 = sphi 0, %s22
    %s25 = sphi 0, %s23
    %s26 = sphi 0, %s24
    %s38 = sphi 0, %s40
    %s41 = sphi 0, %s38
    %s42 = sphi 0, %s41
    %s58 = sphi 0, %s42
    %s62 = sphi 0, %s62
    %s64 = sphi 0, %s62
    %s65 = sphi 0, %s64
    %s79 = sphi 0, %s65
    %s83 = sphi 0, %s83
    %s85 = sphi 0, %s83
    %s86 = sphi 0, %s85
    %s100 = sphi 0, %s86
    %s104 = sphi 0, %s104
    %s106 = sphi 0, %s104
    %s107 = sphi 0, %s106
    %s121 = sphi 0, %s107
    %s127 = sphi 0, %s129
    %s130 = sphi 0, %s127
    %s131 = sphi 0, %s130
    %s147 = sphi 0, %s131
    %s153 = sphi 0, %s155
    %s156 = sphi 0, %s153
    %s157 = sphi 0, %s156
    %s173 = sphi 0, %s157
    %s177 = sphi 0, %s177
    %s179 = sphi 0, %s177
    %s180 = sphi 0, %s179
    %s194 = sphi 0, %s180
    %s202 = sphi 0, %s204
    %s205 = sphi 0, %s202
    %s206 = sphi 0, %s205
    %s222 = sphi 0, %s206
  $region4: #{tpu_custom_call.1} parent=0 // loop_header_branch
    %17 = sbr.rel (%p15) target = $region8
  $region5: #{tpu_custom_call.1} parent=0 // loop_body
    %s19 = ssub.s32 %s14, 1
    %s20 = ssub.s32 %s14, 2
    %s27 = sadd.s32 1, %s22
    %p28 = scmp.ge.s32.totalorder %s27, 1
    %s29 = scalar_select %p28, 0, %s27
    %s30 = sadd.s32 1, %s21
    %s31 = scalar_select %p28, %s30, %s21
    %p32 = scmp.ge.s32.totalorder %s31, 2
    %s33 = scalar_select %p32, 0, %s31
    %s34 = ssub.s32 %s21, %s33
    %s35 = ssub.s32 %s22, %s29
    %s36 = sor.u32 %s34, %s35
    %p37 = scmp.eq.s32.totalorder %s36, 0
    %s39 = sadd.s32 %s38, 1
    %s40 = scalar_select %p37, %s38, %s39
    %p43 = pneg %p37
    %p44 = scmp.eq.s32.totalorder %s14, 1
    %p45 = por %p43, %p44
    %p46 = scmp.ne.s32.totalorder %s38, %s41
    %p47 = scmp.eq.s32.totalorder %s14, 0
    %p48 = por %p46, %p47
    %p49 = scmp.ne.s32.totalorder %s38, %s41
    %p50 = scmp.eq.s32.totalorder %s19, 1
    %p51 = por %p49, %p50
    %p52 = scmp.ne.s32.totalorder %s41, %s42
    %p53 = scmp.eq.s32.totalorder %s19, 0
    %p54 = por %p52, %p53
    %p55 = scmp.ne.s32.totalorder %s41, %s42
    %p56 = scmp.eq.s32.totalorder %s20, 1
    %p57 = por %p55, %p56
    %p59 = scmp.ne.s32.totalorder %s42, %s58
    %p60 = scmp.eq.s32.totalorder %s20, 0
    %p61 = por %p59, %p60
    %s63 = sadd.s32 %s62, 1
    %p66 = scmp.eq.s32.totalorder %s14, 1
    %p67 = scmp.ne.s32.totalorder %s62, %s64
    %p68 = scmp.eq.s32.totalorder %s14, 0
    %p69 = por %p67, %p68
    %p70 = scmp.ne.s32.totalorder %s62, %s64
    %p71 = scmp.eq.s32.totalorder %s19, 1
    %p72 = por %p70, %p71
    %p73 = scmp.ne.s32.totalorder %s64, %s65
    %p74 = scmp.eq.s32.totalorder %s19, 0
    %p75 = por %p73, %p74
    %p76 = scmp.ne.s32.totalorder %s64, %s65
    %p77 = scmp.eq.s32.totalorder %s20, 1
    %p78 = por %p76, %p77
    %p80 = scmp.ne.s32.totalorder %s65, %s79
    %p81 = scmp.eq.s32.totalorder %s20, 0
    %p82 = por %p80, %p81
    %s84 = sadd.s32 %s83, 1
    %p87 = scmp.eq.s32.totalorder %s14, 1
    %p88 = scmp.ne.s32.totalorder %s83, %s85
    %p89 = scmp.eq.s32.totalorder %s14, 0
    %p90 = por %p88, %p89
    %p91 = scmp.ne.s32.totalorder %s83, %s85
    %p92 = scmp.eq.s32.totalorder %s19, 1
    %p93 = por %p91, %p92
    %p94 = scmp.ne.s32.totalorder %s85, %s86
    %p95 = scmp.eq.s32.totalorder %s19, 0
    %p96 = por %p94, %p95
    %p97 = scmp.ne.s32.totalorder %s85, %s86
    %p98 = scmp.eq.s32.totalorder %s20, 1
    %p99 = por %p97, %p98
    %p101 = scmp.ne.s32.totalorder %s86, %s100
    %p102 = scmp.eq.s32.totalorder %s20, 0
    %p103 = por %p101, %p102
    %s105 = sadd.s32 %s104, 1
    %p108 = scmp.eq.s32.totalorder %s14, 1
    %p109 = scmp.ne.s32.totalorder %s104, %s106
    %p110 = scmp.eq.s32.totalorder %s14, 0
    %p111 = por %p109, %p110
    %p112 = scmp.ne.s32.totalorder %s104, %s106
    %p113 = scmp.eq.s32.totalorder %s19, 1
    %p114 = por %p112, %p113
    %p115 = scmp.ne.s32.totalorder %s106, %s107
    %p116 = scmp.eq.s32.totalorder %s19, 0
    %p117 = por %p115, %p116
    %p118 = scmp.ne.s32.totalorder %s106, %s107
    %p119 = scmp.eq.s32.totalorder %s20, 1
    %p120 = por %p118, %p119
    %p122 = scmp.ne.s32.totalorder %s107, %s121
    %p123 = scmp.eq.s32.totalorder %s20, 0
    %p124 = por %p122, %p123
    %s125 = ssub.s32 %s21, %s33
    %p126 = scmp.eq.s32.totalorder %s125, 0
    %s128 = sadd.s32 %s127, 1
    %s129 = scalar_select %p126, %s127, %s128
    %p132 = pneg %p126
    %p133 = scmp.eq.s32.totalorder %s14, 1
    %p134 = por %p132, %p133
    %p135 = scmp.ne.s32.totalorder %s127, %s130
    %p136 = scmp.eq.s32.totalorder %s14, 0
    %p137 = por %p135, %p136
    %p138 = scmp.ne.s32.totalorder %s127, %s130
    %p139 = scmp.eq.s32.totalorder %s19, 1
    %p140 = por %p138, %p139
    %p141 = scmp.ne.s32.totalorder %s130, %s131
    %p142 = scmp.eq.s32.totalorder %s19, 0
    %p143 = por %p141, %p142
    %p144 = scmp.ne.s32.totalorder %s130, %s131
    %p145 = scmp.eq.s32.totalorder %s20, 1
    %p146 = por %p144, %p145
    %p148 = scmp.ne.s32.totalorder %s131, %s147
    %p149 = scmp.eq.s32.totalorder %s20, 0
    %p150 = por %p148, %p149
    %s151 = ssub.s32 %s21, %s33
    %p152 = scmp.eq.s32.totalorder %s151, 0
    %s154 = sadd.s32 %s153, 1
    %s155 = scalar_select %p152, %s153, %s154
    %p158 = pneg %p152
    %p159 = scmp.eq.s32.totalorder %s14, 1
    %p160 = por %p158, %p159
    %p161 = scmp.ne.s32.totalorder %s153, %s156
    %p162 = scmp.eq.s32.totalorder %s14, 0
    %p163 = por %p161, %p162
    %p164 = scmp.ne.s32.totalorder %s153, %s156
    %p165 = scmp.eq.s32.totalorder %s19, 1
    %p166 = por %p164, %p165
    %p167 = scmp.ne.s32.totalorder %s156, %s157
    %p168 = scmp.eq.s32.totalorder %s19, 0
    %p169 = por %p167, %p168
    %p170 = scmp.ne.s32.totalorder %s156, %s157
    %p171 = scmp.eq.s32.totalorder %s20, 1
    %p172 = por %p170, %p171
    %p174 = scmp.ne.s32.totalorder %s157, %s173
    %p175 = scmp.eq.s32.totalorder %s20, 0
    %p176 = por %p174, %p175
    %s178 = sadd.s32 %s177, 1
    %p181 = scmp.eq.s32.totalorder %s14, 1
    %p182 = scmp.ne.s32.totalorder %s177, %s179
    %p183 = scmp.eq.s32.totalorder %s14, 0
    %p184 = por %p182, %p183
    %p185 = scmp.ne.s32.totalorder %s177, %s179
    %p186 = scmp.eq.s32.totalorder %s19, 1
    %p187 = por %p185, %p186
    %p188 = scmp.ne.s32.totalorder %s179, %s180
    %p189 = scmp.eq.s32.totalorder %s19, 0
    %p190 = por %p188, %p189
    %p191 = scmp.ne.s32.totalorder %s179, %s180
    %p192 = scmp.eq.s32.totalorder %s20, 1
    %p193 = por %p191, %p192
    %p195 = scmp.ne.s32.totalorder %s180, %s194
    %p196 = scmp.eq.s32.totalorder %s20, 0
    %p197 = por %p195, %p196
    %s198 = ssub.s32 %s21, %s33
    %s199 = ssub.s32 %s22, %s29
    %s200 = sor.u32 %s198, %s199
    %p201 = scmp.eq.s32.totalorder %s200, 0
    %s203 = sadd.s32 %s202, 1
    %s204 = scalar_select %p201, %s202, %s203
    %p207 = pneg %p201
    %p208 = scmp.eq.s32.totalorder %s14, 1
    %p209 = por %p207, %p208
    %p210 = scmp.ne.s32.totalorder %s202, %s205
    %p211 = scmp.eq.s32.totalorder %s14, 0
    %p212 = por %p210, %p211
    %p213 = scmp.ne.s32.totalorder %s202, %s205
    %p214 = scmp.eq.s32.totalorder %s19, 1
    %p215 = por %p213, %p214
    %p216 = scmp.ne.s32.totalorder %s205, %s206
    %p217 = scmp.eq.s32.totalorder %s19, 0
    %p218 = por %p216, %p217
    %p219 = scmp.ne.s32.totalorder %s205, %s206
    %p220 = scmp.eq.s32.totalorder %s20, 1
    %p221 = por %p219, %p220
    %p223 = scmp.ne.s32.totalorder %s206, %s222
    %p224 = scmp.eq.s32.totalorder %s20, 0
    %p225 = por %p223, %p224
    %p226 = scmp.le.s32.totalorder 1, %s14
    %p227 = scmp.lt.s32.totalorder %s14, 3
    %p228 = pnand %p226, %p227
    %p229 = pneg %p228
    // Predicated region
    $region9: #{tpu_custom_call.1} parent=5 // pred_check
      _
    $region10: #{tpu_custom_call.1} parent=5 // pred_check_branch
      %231 = sbr.rel (%p228) target = $region12
    $region11: #{tpu_custom_call.1} parent=5 // pred_region
      %s232 = ssub.s32 %s14, 1
      // Predicated region
      $region13: #{tpu_custom_call.1} parent=11 // pred_check
        %p233 = pneg %p75
      $region14: #{tpu_custom_call.1} parent=11 // pred_check_branch
        %235 = sbr.rel (%p233) target = $region16
      $region15: #{tpu_custom_call.1} parent=11 // pred_region
        _
      $region16: #{tpu_custom_call.1} parent=11 // pred_fallthru
        _
      // Predicated region
      $region17: #{tpu_custom_call.1} parent=11 // pred_check
        %p236 = pneg %p96
      $region18: #{tpu_custom_call.1} parent=11 // pred_check_branch
        %238 = sbr.rel (%p236) target = $region20
      $region19: #{tpu_custom_call.1} parent=11 // pred_region
        _
      $region20: #{tpu_custom_call.1} parent=11 // pred_fallthru
        _
      // Predicated region
      $region21: #{tpu_custom_call.1} parent=11 // pred_check
        %p239 = pneg %p117
      $region22: #{tpu_custom_call.1} parent=11 // pred_check_branch
        %241 = sbr.rel (%p239) target = $region24
      $region23: #{tpu_custom_call.1} parent=11 // pred_region
        _
      $region24: #{tpu_custom_call.1} parent=11 // pred_fallthru
        _
      // Predicated region
      $region25: #{tpu_custom_call.1} parent=11 // pred_check
        %p242 = pneg %p190
      $region26: #{tpu_custom_call.1} parent=11 // pred_check_branch
        %244 = sbr.rel (%p242) target = $region28
      $region27: #{tpu_custom_call.1} parent=11 // pred_region
        _
      $region28: #{tpu_custom_call.1} parent=11 // pred_fallthru
        _
    $region12: #{tpu_custom_call.1} parent=5 // pred_fallthru
      _
    %p245 = scmp.lt.s32.totalorder %s14, 2
    // Predicated region
    $region29: #{tpu_custom_call.1} parent=5 // pred_check
      %p246 = pneg %p245
    $region30: #{tpu_custom_call.1} parent=5 // pred_check_branch
      %248 = sbr.rel (%p246) target = $region32
    $region31: #{tpu_custom_call.1} parent=5 // pred_region
      // Predicated region
      $region33: #{tpu_custom_call.1} parent=31 // pred_check
        %p249 = pneg %p48
      $region34: #{tpu_custom_call.1} parent=31 // pred_check_branch
        %251 = sbr.rel (%p249) target = $region36
      $region35: #{tpu_custom_call.1} parent=31 // pred_region
        %s252 = smul.u32 32, %s22
        %p253 = scmp.lt.s32.totalorder %s21, 1
        %s254 = scalar_select %p253, %s21, 1
        %p255 = scmp.lt.s32.totalorder %s252, 31
        %s256 = scalar_select %p255, %s252, 31
        %s257 = smul.addr %s254, 32
        %s258 = sadd.s32 %s256, %s257
        %s259 = smul.addr %s258, 4
        %s260 = scalar_lea.vmem %s0, %s259
        %s261 = smul.u32 32, %s22
      $region36: #{tpu_custom_call.1} parent=31 // pred_fallthru
        _
      // Predicated region
      $region37: #{tpu_custom_call.1} parent=31 // pred_check
        %p262 = pneg %p137
      $region38: #{tpu_custom_call.1} parent=31 // pred_check_branch
        %264 = sbr.rel (%p262) target = $region40
      $region39: #{tpu_custom_call.1} parent=31 // pred_region
        %p265 = scmp.lt.s32.totalorder %s21, 1
        %s266 = scalar_select %p265, %s21, 1
        %s267 = scalar_lea.vmem %s4, %s266
      $region40: #{tpu_custom_call.1} parent=31 // pred_fallthru
        _
      // Predicated region
      $region41: #{tpu_custom_call.1} parent=31 // pred_check
        %p268 = pneg %p163
      $region42: #{tpu_custom_call.1} parent=31 // pred_check_branch
        %270 = sbr.rel (%p268) target = $region44
      $region43: #{tpu_custom_call.1} parent=31 // pred_region
        %p271 = scmp.lt.s32.totalorder %s21, 1
        %s272 = scalar_select %p271, %s21, 1
        %s273 = scalar_lea.vmem %s5, %s272
      $region44: #{tpu_custom_call.1} parent=31 // pred_fallthru
        _
    $region32: #{tpu_custom_call.1} parent=5 // pred_fallthru
      _
    %p274 = scmp.le.s32.totalorder 1, %s14
    %p275 = scmp.lt.s32.totalorder %s14, 3
    %p276 = pnand %p274, %p275
    %p277 = pneg %p276
    // Predicated region
    $region45: #{tpu_custom_call.1} parent=5 // pred_check
      _
    $region46: #{tpu_custom_call.1} parent=5 // pred_check_branch
      %279 = sbr.rel (%p276) target = $region48
    $region47: #{tpu_custom_call.1} parent=5 // pred_region
      %s280 = ssub.s32 %s14, 1
      %s281 = smul.u32 32, %s24
      %p282 = scmp.lt.s32.totalorder %s23, 1
      %s283 = scalar_select %p282, %s23, 1
      %p284 = scmp.lt.s32.totalorder %s281, 31
      %s285 = scalar_select %p284, %s281, 31
      %s286 = smul.addr %s283, 32
      %s287 = sadd.s32 %s285, %s286
      %s288 = smul.addr %s287, 4
      %s289 = scalar_lea.vmem %s0, %s288
      %p290 = pneg %p54
      %p291 = pneg %p51
      %p292 = pneg %p75
      %p293 = pneg %p72
      %p294 = pneg %p96
      %p295 = pneg %p93
      %p296 = pneg %p117
      %p297 = pneg %p114
      %p298 = scmp.lt.s32.totalorder %s23, 1
      %s299 = scalar_select %p298, %s23, 1
      %s300 = scalar_lea.vmem %s4, %s299
      %p301 = pneg %p143
      %p302 = pneg %p140
      %p303 = scmp.lt.s32.totalorder %s23, 1
      %s304 = scalar_select %p303, %s23, 1
      %s305 = scalar_lea.vmem %s5, %s304
      %p306 = pneg %p169
      %p307 = pneg %p166
      %p308 = pneg %p190
      %p309 = pneg %p187
      %p310 = pneg %p218
      %p311 = pneg %p215
      %s312 = smul.u32 32, %s24
      %p313 = scmp.lt.s32.totalorder %s23, 1
      %s314 = scalar_select %p313, %s23, 1
      %p315 = scmp.lt.s32.totalorder %s312, 31
      %s316 = scalar_select %p315, %s312, 31
      %s317 = smul.addr %s314, 32
      %s318 = sadd.s32 %s316, %s317
      %s319 = smul.addr %s318, 4
      %s320 = scalar_lea.vmem %s7, %s319
      %s321 = smul.u32 32, %s24
      %p322 = scmp.lt.s32.totalorder %s23, 1
      %s323 = scalar_select %p322, %s23, 1
      %p324 = scmp.lt.s32.totalorder %s321, 31
      %s325 = scalar_select %p324, %s321, 31
      %s326 = smul.addr %s323, 32
      %s327 = sadd.s32 %s325, %s326
      %s328 = smul.addr %s327, 4
      %s329 = scalar_lea.vmem %s0, %s328
      %s330 = smul.u32 32, %s24
      %p331 = scmp.lt.s32.totalorder %s23, 1
      %s332 = scalar_select %p331, %s23, 1
      %s333 = scalar_lea.vmem %s4, %s332
      %p334 = scmp.lt.s32.totalorder %s23, 1
      %s335 = scalar_select %p334, %s23, 1
      %s336 = scalar_lea.vmem %s5, %s335
      %s337 = smul.u32 32, %s24
      %p338 = scmp.lt.s32.totalorder %s23, 1
      %s339 = scalar_select %p338, %s23, 1
      %p340 = scmp.lt.s32.totalorder %s337, 31
      %s341 = scalar_select %p340, %s337, 31
      %s342 = smul.addr %s339, 32
      %s343 = sadd.s32 %s341, %s342
      %s344 = smul.addr %s343, 4
      %s345 = scalar_lea.vmem %s7, %s344
      %s346 = smul.u32 32, %s24
      %v348 = vld [vmem:[%s329] sm:$0xf]
      %v349 = vld [vmem:[%s329 + $0x4] sm:$0xf]
      %v350 = vld [vmem:[%s329 + $0x8] sm:$0xf]
      %v351 = vld [vmem:[%s329 + $0xc] sm:$0xf]
      %v352 = vld [vmem:[%s329 + $0x10] sm:$0xf]
      %v353 = vld [vmem:[%s329 + $0x14] sm:$0xf]
      %v354 = vld [vmem:[%s329 + $0x18] sm:$0xf]
      %v355 = vld [vmem:[%s329 + $0x1c] sm:$0xf]
      %v356 = vld [vmem:[%s329 + $0x20] sm:$0xf]
      %v357 = vld [vmem:[%s329 + $0x24] sm:$0xf]
      %v358 = vld [vmem:[%s329 + $0x28] sm:$0xf]
      %v359 = vld [vmem:[%s329 + $0x2c] sm:$0xf]
      %v360 = vld [vmem:[%s329 + $0x30] sm:$0xf]
      %v361 = vld [vmem:[%s329 + $0x34] sm:$0xf]
      %v362 = vld [vmem:[%s329 + $0x38] sm:$0xf]
      %v363 = vld [vmem:[%s329 + $0x3c] sm:$0xf]
      %v364 = vld [vmem:[%s329 + $0x40] sm:$0xf]
      %v365 = vld [vmem:[%s329 + $0x44] sm:$0xf]
      %v366 = vld [vmem:[%s329 + $0x48] sm:$0xf]
      %v367 = vld [vmem:[%s329 + $0x4c] sm:$0xf]
      %v368 = vld [vmem:[%s329 + $0x50] sm:$0xf]
      %v369 = vld [vmem:[%s329 + $0x54] sm:$0xf]
      %v370 = vld [vmem:[%s329 + $0x58] sm:$0xf]
      %v371 = vld [vmem:[%s329 + $0x5c] sm:$0xf]
      %v372 = vld [vmem:[%s329 + $0x60] sm:$0xf]
      %v373 = vld [vmem:[%s329 + $0x64] sm:$0xf]
      %v374 = vld [vmem:[%s329 + $0x68] sm:$0xf]
      %v375 = vld [vmem:[%s329 + $0x6c] sm:$0xf]
      %v376 = vld [vmem:[%s329 + $0x70] sm:$0xf]
      %v377 = vld [vmem:[%s329 + $0x74] sm:$0xf]
      %v378 = vld [vmem:[%s329 + $0x78] sm:$0xf]
      %v379 = vld [vmem:[%s329 + $0x7c] sm:$0xf]
      %v380 = vld [vmem:[%s1] sm:$0xf]
      %v381 = vld [vmem:[%s1 + $0x4] sm:$0xf]
      %v414 = vunpack.c.l.b16 %v348
      %v415 = vunpack.c.l.b16 %v349
      %v416 = vunpack.c.l.b16 %v350
      %v417 = vunpack.c.l.b16 %v351
      %v418 = vunpack.c.l.b16 %v352
      %v419 = vunpack.c.l.b16 %v353
      %v420 = vunpack.c.l.b16 %v354
      %v421 = vunpack.c.l.b16 %v355
      %v422 = vunpack.c.l.b16 %v356
      %v423 = vunpack.c.l.b16 %v357
      %v424 = vunpack.c.l.b16 %v358
      %v425 = vunpack.c.l.b16 %v359
      %v426 = vunpack.c.l.b16 %v360
      %v427 = vunpack.c.l.b16 %v361
      %v428 = vunpack.c.l.b16 %v362
      %v429 = vunpack.c.l.b16 %v363
      %v430 = vunpack.c.l.b16 %v364
      %v431 = vunpack.c.l.b16 %v365
      %v432 = vunpack.c.l.b16 %v366
      %v433 = vunpack.c.l.b16 %v367
      %v434 = vunpack.c.l.b16 %v368
      %v435 = vunpack.c.l.b16 %v369
      %v436 = vunpack.c.l.b16 %v370
      %v437 = vunpack.c.l.b16 %v371
      %v438 = vunpack.c.l.b16 %v372
      %v439 = vunpack.c.l.b16 %v373
      %v440 = vunpack.c.l.b16 %v374
      %v441 = vunpack.c.l.b16 %v375
      %v442 = vunpack.c.l.b16 %v376
      %v443 = vunpack.c.l.b16 %v377
      %v444 = vunpack.c.l.b16 %v378
      %v445 = vunpack.c.l.b16 %v379
      %v446 = vpack.c.b16 %v415, %v414
      %v447 = vpack.c.b16 %v417, %v416
      %v448 = vpack.c.b16 %v419, %v418
      %v449 = vpack.c.b16 %v421, %v420
      %v450 = vpack.c.b16 %v423, %v422
      %v451 = vpack.c.b16 %v425, %v424
      %v452 = vpack.c.b16 %v427, %v426
      %v453 = vpack.c.b16 %v429, %v428
      %v454 = vpack.c.b16 %v431, %v430
      %v455 = vpack.c.b16 %v433, %v432
      %v456 = vpack.c.b16 %v435, %v434
      %v457 = vpack.c.b16 %v437, %v436
      %v458 = vpack.c.b16 %v439, %v438
      %v459 = vpack.c.b16 %v441, %v440
      %v460 = vpack.c.b16 %v443, %v442
      %v461 = vpack.c.b16 %v445, %v444
      %v464 = vunpack.c.l.b16 %v380
      %v465 = vunpack.c.l.b16 %v381
      %v466 = vpack.c.b16 %v465, %v464
      %vm468 = vcmask 130048
      %v470 = vsel %vm468, %v446, 0
      %v473 = vsel %vm468, %v447, 0
      %v476 = vsel %vm468, %v448, 0
      %v479 = vsel %vm468, %v449, 0
      %v482 = vsel %vm468, %v450, 0
      %v485 = vsel %vm468, %v451, 0
      %v488 = vsel %vm468, %v452, 0
      %v491 = vsel %vm468, %v453, 0
      %v494 = vsel %vm468, %v454, 0
      %v497 = vsel %vm468, %v455, 0
      %v500 = vsel %vm468, %v456, 0
      %v503 = vsel %vm468, %v457, 0
      %v506 = vsel %vm468, %v458, 0
      %v509 = vsel %vm468, %v459, 0
      %v512 = vsel %vm468, %v460, 0
      %v515 = vsel %vm468, %v461, 0
      %517 = vmatprep.subr.bf16.mxu0 0
      %518 = vmatpush1.bf16.msra.mxu0 %v466
      %519 = vmatprep.subr.bf16.mxu0 0
      %520 = vmatpush1.bf16.msra.mxu0 0
      %521 = vmatprep.subr.bf16.mxu0 0
      %522 = vmatpush1.bf16.msra.mxu0 0
      %523 = vmatprep.subr.bf16.mxu0 0
      %524 = vmatpush1.bf16.msra.mxu0 0
      %525 = vmatprep.subr.bf16.mxu0 0
      %526 = vmatpush1.bf16.msra.mxu0 0
      %527 = vmatprep.subr.bf16.mxu0 0
      %528 = vmatpush1.bf16.msra.mxu0 0
      %529 = vmatprep.subr.bf16.mxu0 0
      %530 = vmatpush1.bf16.msra.mxu0 0
      %531 = vmatprep.subr.bf16.mxu0 0
      %532 = vmatpush1.bf16.msra.mxu0 0
      %533 = vmatprep.subr.bf16.mxu0 0
      %534 = vmatpush1.bf16.msra.mxu0 0
      %535 = vmatprep.subr.bf16.mxu0 0
      %536 = vmatpush1.bf16.msra.mxu0 0
      %537 = vmatprep.subr.bf16.mxu0 0
      %538 = vmatpush1.bf16.msra.mxu0 0
      %539 = vmatprep.subr.bf16.mxu0 0
      %540 = vmatpush1.bf16.msra.mxu0 0
      %541 = vmatprep.subr.bf16.mxu0 0
      %542 = vmatpush1.bf16.msra.mxu0 0
      %543 = vmatprep.subr.bf16.mxu0 0
      %544 = vmatpush1.bf16.msra.mxu0 0
      %545 = vmatprep.subr.bf16.mxu0 0
      %546 = vmatpush1.bf16.msra.mxu0 0
      %547 = vmatprep.subr.bf16.mxu0 0
      %548 = vmatpush1.bf16.msra.mxu0 0
      %549 = vmatprep.mubr.bf16.mxu0 0
      %550 = vmatmul.mubr.bf16.gmra.mrb[0].mxu0 %v470
      %v551 = vpop.f32.mrb[0].mxu0
      %v552 = vadd.f32 0.0, %v551
      %v553 = vpop.f32.mrb[0].mxu0
      %v554 = vpop.f32.mrb[0].mxu0
      %v555 = vadd.f32 0.0, %v554
      %v556 = vpop.f32.mrb[0].mxu0
      %557 = vmatprep.mubr.bf16.mxu0 0
      %558 = vmatmul.mubr.bf16.gmra.mrb[0].mxu0 %v473
      %v559 = vpop.f32.mrb[0].mxu0
      %v560 = vadd.f32 0.0, %v559
      %v561 = vpop.f32.mrb[0].mxu0
      %v562 = vpop.f32.mrb[0].mxu0
      %v563 = vadd.f32 0.0, %v562
      %v564 = vpop.f32.mrb[0].mxu0
      %565 = vmatprep.mubr.bf16.mxu0 0
      %566 = vmatmul.mubr.bf16.gmra.mrb[0].mxu0 %v476
      %v567 = vpop.f32.mrb[0].mxu0
      %v568 = vadd.f32 0.0, %v567
      %v569 = vpop.f32.mrb[0].mxu0
      %v570 = vpop.f32.mrb[0].mxu0
      %v571 = vadd.f32 0.0, %v570
      %v572 = vpop.f32.mrb[0].mxu0
      %573 = vmatprep.mubr.bf16.mxu0 0
      %574 = vmatmul.mubr.bf16.gmra.mrb[0].mxu0 %v479
      %v575 = vpop.f32.mrb[0].mxu0
      %v576 = vadd.f32 0.0, %v575
      %v577 = vpop.f32.mrb[0].mxu0
      %v578 = vpop.f32.mrb[0].mxu0
      %v579 = vadd.f32 0.0, %v578
      %v580 = vpop.f32.mrb[0].mxu0
      %581 = vmatprep.mubr.bf16.mxu0 0
      %582 = vmatmul.mubr.bf16.gmra.mrb[0].mxu0 %v482
      %v583 = vpop.f32.mrb[0].mxu0
      %v584 = vadd.f32 0.0, %v583
      %v585 = vpop.f32.mrb[0].mxu0
      %v586 = vpop.f32.mrb[0].mxu0
      %v587 = vadd.f32 0.0, %v586
      %v588 = vpop.f32.mrb[0].mxu0
      %589 = vmatprep.mubr.bf16.mxu0 0
      %590 = vmatmul.mubr.bf16.gmra.mrb[0].mxu0 %v485
      %v591 = vpop.f32.mrb[0].mxu0
      %v592 = vadd.f32 0.0, %v591
      %v593 = vpop.f32.mrb[0].mxu0
      %v594 = vpop.f32.mrb[0].mxu0
      %v595 = vadd.f32 0.0, %v594
      %v596 = vpop.f32.mrb[0].mxu0
      %597 = vmatprep.mubr.bf16.mxu0 0
      %598 = vmatmul.mubr.bf16.gmra.mrb[0].mxu0 %v488
      %v599 = vpop.f32.mrb[0].mxu0
      %v600 = vadd.f32 0.0, %v599
      %v601 = vpop.f32.mrb[0].mxu0
      %v602 = vpop.f32.mrb[0].mxu0
      %v603 = vadd.f32 0.0, %v602
      %v604 = vpop.f32.mrb[0].mxu0
      %605 = vmatprep.mubr.bf16.mxu0 0
      %606 = vmatmul.mubr.bf16.gmra.mrb[0].mxu0 %v491
      %v607 = vpop.f32.mrb[0].mxu0
      %v608 = vadd.f32 0.0, %v607
      %v609 = vpop.f32.mrb[0].mxu0
      %v610 = vpop.f32.mrb[0].mxu0
      %v611 = vadd.f32 0.0, %v610
      %v612 = vpop.f32.mrb[0].mxu0
      %613 = vmatprep.mubr.bf16.mxu0 0
      %614 = vmatmul.mubr.bf16.gmra.mrb[0].mxu0 %v494
      %v615 = vpop.f32.mrb[0].mxu0
      %v616 = vadd.f32 0.0, %v615
      %v617 = vpop.f32.mrb[0].mxu0
      %v618 = vpop.f32.mrb[0].mxu0
      %v619 = vadd.f32 0.0, %v618
      %v620 = vpop.f32.mrb[0].mxu0
      %621 = vmatprep.mubr.bf16.mxu0 0
      %622 = vmatmul.mubr.bf16.gmra.mrb[0].mxu0 %v497
      %v623 = vpop.f32.mrb[0].mxu0
      %v624 = vadd.f32 0.0, %v623
      %v625 = vpop.f32.mrb[0].mxu0
      %v626 = vpop.f32.mrb[0].mxu0
      %v627 = vadd.f32 0.0, %v626
      %v628 = vpop.f32.mrb[0].mxu0
      %629 = vmatprep.mubr.bf16.mxu0 0
      %630 = vmatmul.mubr.bf16.gmra.mrb[0].mxu0 %v500
      %v631 = vpop.f32.mrb[0].mxu0
      %v632 = vadd.f32 0.0, %v631
      %v633 = vpop.f32.mrb[0].mxu0
      %v634 = vpop.f32.mrb[0].mxu0
      %v635 = vadd.f32 0.0, %v634
      %v636 = vpop.f32.mrb[0].mxu0
      %637 = vmatprep.mubr.bf16.mxu0 0
      %638 = vmatmul.mubr.bf16.gmra.mrb[0].mxu0 %v503
      %v639 = vpop.f32.mrb[0].mxu0
      %v640 = vadd.f32 0.0, %v639
      %v641 = vpop.f32.mrb[0].mxu0
      %v642 = vpop.f32.mrb[0].mxu0
      %v643 = vadd.f32 0.0, %v642
      %v644 = vpop.f32.mrb[0].mxu0
      %645 = vmatprep.mubr.bf16.mxu0 0
      %646 = vmatmul.mubr.bf16.gmra.mrb[0].mxu0 %v506
      %v647 = vpop.f32.mrb[0].mxu0
      %v648 = vadd.f32 0.0, %v647
      %v649 = vpop.f32.mrb[0].mxu0
      %v650 = vpop.f32.mrb[0].mxu0
      %v651 = vadd.f32 0.0, %v650
      %v652 = vpop.f32.mrb[0].mxu0
      %653 = vmatprep.mubr.bf16.mxu0 0
      %654 = vmatmul.mubr.bf16.gmra.mrb[0].mxu0 %v509
      %v655 = vpop.f32.mrb[0].mxu0
      %v656 = vadd.f32 0.0, %v655
      %v657 = vpop.f32.mrb[0].mxu0
      %v658 = vpop.f32.mrb[0].mxu0
      %v659 = vadd.f32 0.0, %v658
      %v660 = vpop.f32.mrb[0].mxu0
      %661 = vmatprep.mubr.bf16.mxu0 0
      %662 = vmatmul.mubr.bf16.gmra.mrb[0].mxu0 %v512
      %v663 = vpop.f32.mrb[0].mxu0
      %v664 = vadd.f32 0.0, %v663
      %v665 = vpop.f32.mrb[0].mxu0
      %v666 = vpop.f32.mrb[0].mxu0
      %v667 = vadd.f32 0.0, %v666
      %v668 = vpop.f32.mrb[0].mxu0
      %669 = vmatprep.mubr.bf16.mxu0 0
      %670 = vmatmul.mubr.bf16.gmra.mrb[0].mxu0 %v515
      %v671 = vpop.f32.mrb[0].mxu0
      %v672 = vadd.f32 0.0, %v671
      %v673 = vpop.f32.mrb[0].mxu0
      %v674 = vpop.f32.mrb[0].mxu0
      %v675 = vadd.f32 0.0, %v674
      %v676 = vpop.f32.mrb[0].mxu0
      %677 = vdwg.mxu0
      %v678 = vld [vmem:[%s2] sm:$0x1]
      %v680 = vlaneseq
      %v681 = vshrl.u32 %v680, 7
      %v682 = vsub.s32 0, %v681
      %v683 = vrot.slane %v678, %v682
      %v685 = vmul.f32 %v552, %v683
      %v686 = vmul.f32 %v555, %v683
      %v687 = vmul.f32 %v560, %v683
      %v688 = vmul.f32 %v563, %v683
      %v689 = vmul.f32 %v568, %v683
      %v690 = vmul.f32 %v571, %v683
      %v691 = vmul.f32 %v576, %v683
      %v692 = vmul.f32 %v579, %v683
      %v693 = vmul.f32 %v584, %v683
      %v694 = vmul.f32 %v587, %v683
      %v695 = vmul.f32 %v592, %v683
      %v696 = vmul.f32 %v595, %v683
      %v697 = vmul.f32 %v600, %v683
      %v698 = vmul.f32 %v603, %v683
      %v699 = vmul.f32 %v608, %v683
      %v700 = vmul.f32 %v611, %v683
      %v701 = vmul.f32 %v616, %v683
      %v702 = vmul.f32 %v619, %v683
      %v703 = vmul.f32 %v624, %v683
      %v704 = vmul.f32 %v627, %v683
      %v705 = vmul.f32 %v632, %v683
      %v706 = vmul.f32 %v635, %v683
      %v707 = vmul.f32 %v640, %v683
      %v708 = vmul.f32 %v643, %v683
      %v709 = vmul.f32 %v648, %v683
      %v710 = vmul.f32 %v651, %v683
      %v711 = vmul.f32 %v656, %v683
      %v712 = vmul.f32 %v659, %v683
      %v713 = vmul.f32 %v664, %v683
      %v714 = vmul.f32 %v667, %v683
      %v715 = vmul.f32 %v672, %v683
      %v716 = vmul.f32 %v675, %v683
      %v717 = vld [vmem:[%s3] sm:$0x1]
      %v719 = vlaneseq
      %v720 = vshrl.u32 %v719, 7
      %v721 = vsub.s32 0, %v720
      %v722 = vrot.slane %v717, %v721
      %v724 = vadd.f32 %v685, %v722
      %v725 = vadd.f32 %v686, %v722
      %v726 = vadd.f32 %v687, %v722
      %v727 = vadd.f32 %v688, %v722
      %v728 = vadd.f32 %v689, %v722
      %v729 = vadd.f32 %v690, %v722
      %v730 = vadd.f32 %v691, %v722
      %v731 = vadd.f32 %v692, %v722
      %v732 = vadd.f32 %v693, %v722
      %v733 = vadd.f32 %v694, %v722
      %v734 = vadd.f32 %v695, %v722
      %v735 = vadd.f32 %v696, %v722
      %v736 = vadd.f32 %v697, %v722
      %v737 = vadd.f32 %v698, %v722
      %v738 = vadd.f32 %v699, %v722
      %v739 = vadd.f32 %v700, %v722
      %v740 = vadd.f32 %v701, %v722
      %v741 = vadd.f32 %v702, %v722
      %v742 = vadd.f32 %v703, %v722
      %v743 = vadd.f32 %v704, %v722
      %v744 = vadd.f32 %v705, %v722
      %v745 = vadd.f32 %v706, %v722
      %v746 = vadd.f32 %v707, %v722
      %v747 = vadd.f32 %v708, %v722
      %v748 = vadd.f32 %v709, %v722
      %v749 = vadd.f32 %v710, %v722
      %v750 = vadd.f32 %v711, %v722
      %v751 = vadd.f32 %v712, %v722
      %v752 = vadd.f32 %v713, %v722
      %v753 = vadd.f32 %v714, %v722
      %v754 = vadd.f32 %v715, %v722
      %v755 = vadd.f32 %v716, %v722
      %v756 = vld [vmem:[%s333] sm:$0x1]
      %v758 = vlaneseq
      %v759 = vshrl.u32 %v758, 7
      %v760 = vsub.s32 0, %v759
      %v761 = vrot.slane %v756, %v760
      %v763 = vmul.f32 %v724, %v761
      %v764 = vmul.f32 %v725, %v761
      %v765 = vmul.f32 %v726, %v761
      %v766 = vmul.f32 %v727, %v761
      %v767 = vmul.f32 %v728, %v761
      %v768 = vmul.f32 %v729, %v761
      %v769 = vmul.f32 %v730, %v761
      %v770 = vmul.f32 %v731, %v761
      %v771 = vmul.f32 %v732, %v761
      %v772 = vmul.f32 %v733, %v761
      %v773 = vmul.f32 %v734, %v761
      %v774 = vmul.f32 %v735, %v761
      %v775 = vmul.f32 %v736, %v761
      %v776 = vmul.f32 %v737, %v761
      %v777 = vmul.f32 %v738, %v761
      %v778 = vmul.f32 %v739, %v761
      %v779 = vmul.f32 %v740, %v761
      %v780 = vmul.f32 %v741, %v761
      %v781 = vmul.f32 %v742, %v761
      %v782 = vmul.f32 %v743, %v761
      %v783 = vmul.f32 %v744, %v761
      %v784 = vmul.f32 %v745, %v761
      %v785 = vmul.f32 %v746, %v761
      %v786 = vmul.f32 %v747, %v761
      %v787 = vmul.f32 %v748, %v761
      %v788 = vmul.f32 %v749, %v761
      %v789 = vmul.f32 %v750, %v761
      %v790 = vmul.f32 %v751, %v761
      %v791 = vmul.f32 %v752, %v761
      %v792 = vmul.f32 %v753, %v761
      %v793 = vmul.f32 %v754, %v761
      %v794 = vmul.f32 %v755, %v761
      %v795 = vld [vmem:[%s336] sm:$0x1]
      %v797 = vlaneseq
      %v798 = vshrl.u32 %v797, 7
      %v799 = vsub.s32 0, %v798
      %v800 = vrot.slane %v795, %v799
      %v802 = vadd.f32 %v763, %v800
      %v803 = vadd.f32 %v764, %v800
      %v804 = vadd.f32 %v765, %v800
      %v805 = vadd.f32 %v766, %v800
      %v806 = vadd.f32 %v767, %v800
      %v807 = vadd.f32 %v768, %v800
      %v808 = vadd.f32 %v769, %v800
      %v809 = vadd.f32 %v770, %v800
      %v810 = vadd.f32 %v771, %v800
      %v811 = vadd.f32 %v772, %v800
      %v812 = vadd.f32 %v773, %v800
      %v813 = vadd.f32 %v774, %v800
      %v814 = vadd.f32 %v775, %v800
      %v815 = vadd.f32 %v776, %v800
      %v816 = vadd.f32 %v777, %v800
      %v817 = vadd.f32 %v778, %v800
      %v818 = vadd.f32 %v779, %v800
      %v819 = vadd.f32 %v780, %v800
      %v820 = vadd.f32 %v781, %v800
      %v821 = vadd.f32 %v782, %v800
      %v822 = vadd.f32 %v783, %v800
      %v823 = vadd.f32 %v784, %v800
      %v824 = vadd.f32 %v785, %v800
      %v825 = vadd.f32 %v786, %v800
      %v826 = vadd.f32 %v787, %v800
      %v827 = vadd.f32 %v788, %v800
      %v828 = vadd.f32 %v789, %v800
      %v829 = vadd.f32 %v790, %v800
      %v830 = vadd.f32 %v791, %v800
      %v831 = vadd.f32 %v792, %v800
      %v832 = vadd.f32 %v793, %v800
      %v833 = vadd.f32 %v794, %v800
      %s834 = sld [smem:[#allocation2]]
      %vm835 = vcmp.ge.f32.partialorder %v802, 0.0
      %vm836 = vcmp.ge.f32.partialorder %v803, 0.0
      %vm837 = vcmp.ge.f32.partialorder %v804, 0.0
      %vm838 = vcmp.ge.f32.partialorder %v805, 0.0
      %vm839 = vcmp.ge.f32.partialorder %v806, 0.0
      %vm840 = vcmp.ge.f32.partialorder %v807, 0.0
      %vm841 = vcmp.ge.f32.partialorder %v808, 0.0
      %vm842 = vcmp.ge.f32.partialorder %v809, 0.0
      %vm843 = vcmp.ge.f32.partialorder %v810, 0.0
      %vm844 = vcmp.ge.f32.partialorder %v811, 0.0
      %vm845 = vcmp.ge.f32.partialorder %v812, 0.0
      %vm846 = vcmp.ge.f32.partialorder %v813, 0.0
      %vm847 = vcmp.ge.f32.partialorder %v814, 0.0
      %vm848 = vcmp.ge.f32.partialorder %v815, 0.0
      %vm849 = vcmp.ge.f32.partialorder %v816, 0.0
      %vm850 = vcmp.ge.f32.partialorder %v817, 0.0
      %vm851 = vcmp.ge.f32.partialorder %v818, 0.0
      %vm852 = vcmp.ge.f32.partialorder %v819, 0.0
      %vm853 = vcmp.ge.f32.partialorder %v820, 0.0
      %vm854 = vcmp.ge.f32.partialorder %v821, 0.0
      %vm855 = vcmp.ge.f32.partialorder %v822, 0.0
      %vm856 = vcmp.ge.f32.partialorder %v823, 0.0
      %vm857 = vcmp.ge.f32.partialorder %v824, 0.0
      %vm858 = vcmp.ge.f32.partialorder %v825, 0.0
      %vm859 = vcmp.ge.f32.partialorder %v826, 0.0
      %vm860 = vcmp.ge.f32.partialorder %v827, 0.0
      %vm861 = vcmp.ge.f32.partialorder %v828, 0.0
      %vm862 = vcmp.ge.f32.partialorder %v829, 0.0
      %vm863 = vcmp.ge.f32.partialorder %v830, 0.0
      %vm864 = vcmp.ge.f32.partialorder %v831, 0.0
      %vm865 = vcmp.ge.f32.partialorder %v832, 0.0
      %vm866 = vcmp.ge.f32.partialorder %v833, 0.0
      %v867 = vstv %s834
      %v868 = vmul.f32 %v867, %v802
      %v869 = vmul.f32 %v867, %v803
      %v870 = vmul.f32 %v867, %v804
      %v871 = vmul.f32 %v867, %v805
      %v872 = vmul.f32 %v867, %v806
      %v873 = vmul.f32 %v867, %v807
      %v874 = vmul.f32 %v867, %v808
      %v875 = vmul.f32 %v867, %v809
      %v876 = vmul.f32 %v867, %v810
      %v877 = vmul.f32 %v867, %v811
      %v878 = vmul.f32 %v867, %v812
      %v879 = vmul.f32 %v867, %v813
      %v880 = vmul.f32 %v867, %v814
      %v881 = vmul.f32 %v867, %v815
      %v882 = vmul.f32 %v867, %v816
      %v883 = vmul.f32 %v867, %v817
      %v884 = vmul.f32 %v867, %v818
      %v885 = vmul.f32 %v867, %v819
      %v886 = vmul.f32 %v867, %v820
      %v887 = vmul.f32 %v867, %v821
      %v888 = vmul.f32 %v867, %v822
      %v889 = vmul.f32 %v867, %v823
      %v890 = vmul.f32 %v867, %v824
      %v891 = vmul.f32 %v867, %v825
      %v892 = vmul.f32 %v867, %v826
      %v893 = vmul.f32 %v867, %v827
      %v894 = vmul.f32 %v867, %v828
      %v895 = vmul.f32 %v867, %v829
      %v896 = vmul.f32 %v867, %v830
      %v897 = vmul.f32 %v867, %v831
      %v898 = vmul.f32 %v867, %v832
      %v899 = vmul.f32 %v867, %v833
      %v900 = vsel %vm835, %v802, %v868
      %v901 = vsel %vm836, %v803, %v869
      %v902 = vsel %vm837, %v804, %v870
      %v903 = vsel %vm838, %v805, %v871
      %v904 = vsel %vm839, %v806, %v872
      %v905 = vsel %vm840, %v807, %v873
      %v906 = vsel %vm841, %v808, %v874
      %v907 = vsel %vm842, %v809, %v875
      %v908 = vsel %vm843, %v810, %v876
      %v909 = vsel %vm844, %v811, %v877
      %v910 = vsel %vm845, %v812, %v878
      %v911 = vsel %vm846, %v813, %v879
      %v912 = vsel %vm847, %v814, %v880
      %v913 = vsel %vm848, %v815, %v881
      %v914 = vsel %vm849, %v816, %v882
      %v915 = vsel %vm850, %v817, %v883
      %v916 = vsel %vm851, %v818, %v884
      %v917 = vsel %vm852, %v819, %v885
      %v918 = vsel %vm853, %v820, %v886
      %v919 = vsel %vm854, %v821, %v887
      %v920 = vsel %vm855, %v822, %v888
      %v921 = vsel %vm856, %v823, %v889
      %v922 = vsel %vm857, %v824, %v890
      %v923 = vsel %vm858, %v825, %v891
      %v924 = vsel %vm859, %v826, %v892
      %v925 = vsel %vm860, %v827, %v893
      %v926 = vsel %vm861, %v828, %v894
      %v927 = vsel %vm862, %v829, %v895
      %v928 = vsel %vm863, %v830, %v896
      %v929 = vsel %vm864, %v831, %v897
      %v930 = vsel %vm865, %v832, %v898
      %v931 = vsel %vm866, %v833, %v899
      %v932 = vpack.c.bf16 %v901, %v900
      %v933 = vpack.c.bf16 %v903, %v902
      %v934 = vpack.c.bf16 %v905, %v904
      %v935 = vpack.c.bf16 %v907, %v906
      %v936 = vpack.c.bf16 %v909, %v908
      %v937 = vpack.c.bf16 %v911, %v910
      %v938 = vpack.c.bf16 %v913, %v912
      %v939 = vpack.c.bf16 %v915, %v914
      %v940 = vpack.c.bf16 %v917, %v916
      %v941 = vpack.c.bf16 %v919, %v918
      %v942 = vpack.c.bf16 %v921, %v920
      %v943 = vpack.c.bf16 %v923, %v922
      %v944 = vpack.c.bf16 %v925, %v924
      %v945 = vpack.c.bf16 %v927, %v926
      %v946 = vpack.c.bf16 %v929, %v928
      %v947 = vpack.c.bf16 %v931, %v930
      %v964 = vunpack.c.l.b16 %v932
      %v965 = vunpack.c.h.b16 %v932
      %v966 = vunpack.c.l.b16 %v933
      %v967 = vunpack.c.h.b16 %v933
      %v968 = vunpack.c.l.b16 %v934
      %v969 = vunpack.c.h.b16 %v934
      %v970 = vunpack.c.l.b16 %v935
      %v971 = vunpack.c.h.b16 %v935
      %v972 = vunpack.c.l.b16 %v936
      %v973 = vunpack.c.h.b16 %v936
      %v974 = vunpack.c.l.b16 %v937
      %v975 = vunpack.c.h.b16 %v937
      %v976 = vunpack.c.l.b16 %v938
      %v977 = vunpack.c.h.b16 %v938
      %v978 = vunpack.c.l.b16 %v939
      %v979 = vunpack.c.h.b16 %v939
      %v980 = vunpack.c.l.b16 %v940
      %v981 = vunpack.c.h.b16 %v940
      %v982 = vunpack.c.l.b16 %v941
      %v983 = vunpack.c.h.b16 %v941
      %v984 = vunpack.c.l.b16 %v942
      %v985 = vunpack.c.h.b16 %v942
      %v986 = vunpack.c.l.b16 %v943
      %v987 = vunpack.c.h.b16 %v943
      %v988 = vunpack.c.l.b16 %v944
      %v989 = vunpack.c.h.b16 %v944
      %v990 = vunpack.c.l.b16 %v945
      %v991 = vunpack.c.h.b16 %v945
      %v992 = vunpack.c.l.b16 %v946
      %v993 = vunpack.c.h.b16 %v946
      %v994 = vunpack.c.l.b16 %v947
      %v995 = vunpack.c.h.b16 %v947
      %v996 = vpack.c.b16 %v964, %v964
      %v997 = vpack.c.b16 %v965, %v965
      %v998 = vpack.c.b16 %v966, %v966
      %v999 = vpack.c.b16 %v967, %v967
      %v1000 = vpack.c.b16 %v968, %v968
      %v1001 = vpack.c.b16 %v969, %v969
      %v1002 = vpack.c.b16 %v970, %v970
      %v1003 = vpack.c.b16 %v971, %v971
      %v1004 = vpack.c.b16 %v972, %v972
      %v1005 = vpack.c.b16 %v973, %v973
      %v1006 = vpack.c.b16 %v974, %v974
      %v1007 = vpack.c.b16 %v975, %v975
      %v1008 = vpack.c.b16 %v976, %v976
      %v1009 = vpack.c.b16 %v977, %v977
      %v1010 = vpack.c.b16 %v978, %v978
      %v1011 = vpack.c.b16 %v979, %v979
      %v1012 = vpack.c.b16 %v980, %v980
      %v1013 = vpack.c.b16 %v981, %v981
      %v1014 = vpack.c.b16 %v982, %v982
      %v1015 = vpack.c.b16 %v983, %v983
      %v1016 = vpack.c.b16 %v984, %v984
      %v1017 = vpack.c.b16 %v985, %v985
      %v1018 = vpack.c.b16 %v986, %v986
      %v1019 = vpack.c.b16 %v987, %v987
      %v1020 = vpack.c.b16 %v988, %v988
      %v1021 = vpack.c.b16 %v989, %v989
      %v1022 = vpack.c.b16 %v990, %v990
      %v1023 = vpack.c.b16 %v991, %v991
      %v1024 = vpack.c.b16 %v992, %v992
      %v1025 = vpack.c.b16 %v993, %v993
      %v1026 = vpack.c.b16 %v994, %v994
      %v1027 = vpack.c.b16 %v995, %v995
      %vm1060 = vcmask 257024
      %1061 = vst.msk [vmem:[%s345] sm:$0xf] %vm1060, %v996
      %1062 = vst.msk [vmem:[%s345 + $0x4] sm:$0xf] %vm1060, %v997
      %1063 = vst.msk [vmem:[%s345 + $0x8] sm:$0xf] %vm1060, %v998
      %1064 = vst.msk [vmem:[%s345 + $0xc] sm:$0xf] %vm1060, %v999
      %1065 = vst.msk [vmem:[%s345 + $0x10] sm:$0xf] %vm1060, %v1000
      %1066 = vst.msk [vmem:[%s345 + $0x14] sm:$0xf] %vm1060, %v1001
      %1067 = vst.msk [vmem:[%s345 + $0x18] sm:$0xf] %vm1060, %v1002
      %1068 = vst.msk [vmem:[%s345 + $0x1c] sm:$0xf] %vm1060, %v1003
      %1069 = vst.msk [vmem:[%s345 + $0x20] sm:$0xf] %vm1060, %v1004
      %1070 = vst.msk [vmem:[%s345 + $0x24] sm:$0xf] %vm1060, %v1005
      %1071 = vst.msk [vmem:[%s345 + $0x28] sm:$0xf] %vm1060, %v1006
      %1072 = vst.msk [vmem:[%s345 + $0x2c] sm:$0xf] %vm1060, %v1007
      %1073 = vst.msk [vmem:[%s345 + $0x30] sm:$0xf] %vm1060, %v1008
      %1074 = vst.msk [vmem:[%s345 + $0x34] sm:$0xf] %vm1060, %v1009
      %1075 = vst.msk [vmem:[%s345 + $0x38] sm:$0xf] %vm1060, %v1010
      %1076 = vst.msk [vmem:[%s345 + $0x3c] sm:$0xf] %vm1060, %v1011
      %1077 = vst.msk [vmem:[%s345 + $0x40] sm:$0xf] %vm1060, %v1012
      %1078 = vst.msk [vmem:[%s345 + $0x44] sm:$0xf] %vm1060, %v1013
      %1079 = vst.msk [vmem:[%s345 + $0x48] sm:$0xf] %vm1060, %v1014
      %1080 = vst.msk [vmem:[%s345 + $0x4c] sm:$0xf] %vm1060, %v1015
      %1081 = vst.msk [vmem:[%s345 + $0x50] sm:$0xf] %vm1060, %v1016
      %1082 = vst.msk [vmem:[%s345 + $0x54] sm:$0xf] %vm1060, %v1017
      %1083 = vst.msk [vmem:[%s345 + $0x58] sm:$0xf] %vm1060, %v1018
      %1084 = vst.msk [vmem:[%s345 + $0x5c] sm:$0xf] %vm1060, %v1019
      %1085 = vst.msk [vmem:[%s345 + $0x60] sm:$0xf] %vm1060, %v1020
      %1086 = vst.msk [vmem:[%s345 + $0x64] sm:$0xf] %vm1060, %v1021
      %1087 = vst.msk [vmem:[%s345 + $0x68] sm:$0xf] %vm1060, %v1022
      %1088 = vst.msk [vmem:[%s345 + $0x6c] sm:$0xf] %vm1060, %v1023
      %1089 = vst.msk [vmem:[%s345 + $0x70] sm:$0xf] %vm1060, %v1024
      %1090 = vst.msk [vmem:[%s345 + $0x74] sm:$0xf] %vm1060, %v1025
      %1091 = vst.msk [vmem:[%s345 + $0x78] sm:$0xf] %vm1060, %v1026
      %1092 = vst.msk [vmem:[%s345 + $0x7c] sm:$0xf] %vm1060, %v1027
      %s1093 = smul.u32 32, %s24
      %p1094 = scmp.lt.s32.totalorder %s23, 1
      %s1095 = scalar_select %p1094, %s23, 1
      %p1096 = scmp.lt.s32.totalorder %s1093, 31
      %s1097 = scalar_select %p1096, %s1093, 31
      %s1098 = smul.addr %s1095, 32
      %s1099 = sadd.s32 %s1097, %s1098
      %s1100 = smul.addr %s1099, 4
      %s1101 = scalar_lea.vmem %s7, %s1100
      // Predicated region
      $region49: #{tpu_custom_call.1} parent=47 // pred_check
        %p1102 = pneg %p215
      $region50: #{tpu_custom_call.1} parent=47 // pred_check_branch
        %1104 = sbr.rel (%p1102) target = $region52
      $region51: #{tpu_custom_call.1} parent=47 // pred_region
        %s1105 = smul.u32 32, %s24
      $region52: #{tpu_custom_call.1} parent=47 // pred_fallthru
        _
    $region48: #{tpu_custom_call.1} parent=5 // pred_fallthru
      _
    %p1106 = scmp.le.s32.totalorder 2, %s14
    // Predicated region
    $region53: #{tpu_custom_call.1} parent=5 // pred_check
      %p1107 = pneg %p1106
    $region54: #{tpu_custom_call.1} parent=5 // pred_check_branch
      %1109 = sbr.rel (%p1107) target = $region56
    $region55: #{tpu_custom_call.1} parent=5 // pred_region
      %s1110 = ssub.s32 %s14, 2
      // Predicated region
      $region57: #{tpu_custom_call.1} parent=55 // pred_check
        %p1111 = pneg %p221
      $region58: #{tpu_custom_call.1} parent=55 // pred_check_branch
        %1113 = sbr.rel (%p1111) target = $region60
      $region59: #{tpu_custom_call.1} parent=55 // pred_region
        %s1114 = smul.u32 32, %s26
        %p1115 = scmp.lt.s32.totalorder %s25, 1
        %s1116 = scalar_select %p1115, %s25, 1
        %p1117 = scmp.lt.s32.totalorder %s1114, 31
        %s1118 = scalar_select %p1117, %s1114, 31
        %s1119 = smul.addr %s1116, 32
        %s1120 = sadd.s32 %s1118, %s1119
        %s1121 = smul.addr %s1120, 4
        %s1122 = scalar_lea.vmem %s7, %s1121
      $region60: #{tpu_custom_call.1} parent=55 // pred_fallthru
        _
    $region56: #{tpu_custom_call.1} parent=5 // pred_fallthru
      _
  $region6: #{tpu_custom_call.1} parent=0 // loop_footer
    %s18 = sadd.s32 1, %s14
  $region7: #{tpu_custom_call.1} parent=0 // loop_footer_branch
    %13 = sbr.rel target = $region3
  $region8: #{tpu_custom_call.1} parent=0 // loop_exit
    _

</llo_original>
